<compile_context>
chip_gen: v6e
topology: v6e:2x2x1
jax: 0.10.0
libtpu: 0.0.40
codegen_flags: <defaults>
</compile_context>

<pallas_src>
import functools

import jax
import jax.numpy as jnp
from jax import lax
from jax.experimental import pallas as pl
from jax.experimental.pallas import tpu as pltpu


def _gelu_tanh(x):
    # tanh-approximation GELU (CustomGelu); x is f32 here.
    c = jnp.float32(0.7978845608028654)  # sqrt(2/pi)
    return 0.5 * x * (1.0 + jnp.tanh(c * (x + 0.044715 * x * x * x)))


def _ffn_kernel(x_ref, w1_ref, w2_ref, o_ref, acc_ref):
    # x_ref:   (tm, d_model)       row tile of the flattened input (resident over k)
    # w1_ref:  (tff, d_model)      slab of w1 in native layout, streamed over k
    # w2_ref:  (d_model, tff)      slab of w2 in native layout, streamed over k
    # o_ref:   (tm, d_model)       output tile (written on the last k)
    # acc_ref: (tm, d_model) f32   accumulator scratch
    k = pl.program_id(1)

    @pl.when(k == 0)
    def _():
        acc_ref[...] = jnp.zeros_like(acc_ref)

    # h = x @ w1_slab.T : contract x's d_model (dim 1) with w1's d_model (dim 1).
    h = lax.dot_general(
        x_ref[...], w1_ref[...],
        dimension_numbers=(((1,), (1,)), ((), ())),
        preferred_element_type=jnp.float32)            # (tm, tff) f32

    g = _gelu_tanh(h)

    # acc += g @ w2_slab.T : contract g's tff (dim 1) with w2's tff (dim 1).
    acc_ref[...] += lax.dot_general(
        g.astype(w2_ref.dtype), w2_ref[...],
        dimension_numbers=(((1,), (1,)), ((), ())),
        preferred_element_type=jnp.float32)            # (tm, d_model) f32

    @pl.when(k == pl.num_programs(1) - 1)
    def _():
        o_ref[...] = acc_ref[...].astype(o_ref.dtype)


def _round_up(x, m):
    return ((x + m - 1) // m) * m


@functools.partial(jax.jit, static_argnames=("tm", "tff"))
def position_wise_ffn(in_features, w1_weight, w2_weight, *, tm=256, tff=512):
    """gelu(in_features @ w1.T) @ w2.T via a fused Pallas TPU kernel.

    in_features: (batch, seq, d_model)
    w1_weight:   (d_ff, d_model)   -- nn.Linear(d_model, d_ff).weight
    w2_weight:   (d_model, d_ff)   -- nn.Linear(d_ff, d_model).weight
    """
    batch, seq, d_model = in_features.shape
    d_ff = w1_weight.shape[0]
    assert w1_weight.shape == (d_ff, d_model)
    assert w2_weight.shape == (d_model, d_ff)

    M = batch * seq
    x2d = in_features.reshape(M, d_model)

    # Row tile: MXU-sized, but never larger than the (8-aligned) row count.
    tm = max(8, min(tm, _round_up(M, 8)))
    M_pad = _round_up(M, tm)
    if M_pad != M:
        x2d = jnp.pad(x2d, ((0, M_pad - M), (0, 0)))

    # Hidden-dim tile: lane-aligned slab of d_ff; pad d_ff to divide evenly.
    d_ff_pad = _round_up(d_ff, 128)
    tff = min(tff, d_ff_pad)
    d_ff_pad = _round_up(d_ff_pad, tff)
    if d_ff_pad != d_ff:
        # Zero rows of w1 -> gelu(0)=0; zero cols of w2 -> zero contribution.
        w1_weight = jnp.pad(w1_weight, ((0, d_ff_pad - d_ff), (0, 0)))
        w2_weight = jnp.pad(w2_weight, ((0, 0), (0, d_ff_pad - d_ff)))

    grid = (M_pad // tm, d_ff_pad // tff)

    # Advisory cost hint so XLA schedules surrounding ops sensibly.
    cost = pl.CostEstimate(
        flops=4 * M * d_model * d_ff,
        transcendentals=M * d_ff,
        bytes_accessed=(x2d.size + M * d_model) * x2d.dtype.itemsize
        + w1_weight.size * w1_weight.dtype.itemsize
        + w2_weight.size * w2_weight.dtype.itemsize,
    )

    # Rough VMEM need: double-buffered x/out tiles + w1/w2 slabs, plus the
    # f32 accumulator and the (tm, tff) f32 intermediate. Raise the scoped
    # limit for big shapes, capped at v7x's 64 MiB physical VMEM.
    itemsize = max(x2d.dtype.itemsize, w1_weight.dtype.itemsize)
    est = (2 * (2 * tm * d_model + 2 * tff * d_model) * itemsize
           + (tm * d_model + 2 * tm * tff) * 4)
    vmem_limit = int(min(max(3 * est, 32 << 20), 64 << 20))

    out2d = pl.pallas_call(
        _ffn_kernel,
        out_shape=jax.ShapeDtypeStruct((M_pad, d_model), in_features.dtype),
        grid_spec=pltpu.PrefetchScalarGridSpec(
            num_scalar_prefetch=0,
            grid=grid,
            in_specs=[
                pl.BlockSpec((tm, d_model), lambda i, k: (i, 0)),
                pl.BlockSpec((tff, d_model), lambda i, k: (k, 0)),
                pl.BlockSpec((d_model, tff), lambda i, k: (0, k)),
            ],
            out_specs=pl.BlockSpec((tm, d_model), lambda i, k: (i, 0)),
            scratch_shapes=[pltpu.VMEM((tm, d_model), jnp.float32)],
        ),
        compiler_params=pltpu.CompilerParams(
            dimension_semantics=("parallel", "arbitrary"),
            vmem_limit_bytes=vmem_limit,
        ),
        cost_estimate=cost,
    )(x2d, w1_weight, w2_weight)

    return out2d[:M].reshape(batch, seq, d_model)


if __name__ == "__main__":
    # Small, lane-friendly shapes.
    batch, seq, d_model, d_ff = 2, 8, 128, 256

    key = jax.random.PRNGKey(0)
    kx, kw1, kw2 = jax.random.split(key, 3)

    x = jax.random.normal(kx, (batch, seq, d_model), dtype=jnp.float32)
    # Deterministic synthetic parameters (shapes per nn.Linear convention).
    w1 = jax.random.normal(kw1, (d_ff, d_model), dtype=jnp.float32) * 0.02
    w2 = jax.random.normal(kw2, (d_model, d_ff), dtype=jnp.float32) * 0.02

    out = position_wise_ffn(x, w1, w2)
    out = jax.block_until_ready(out)

    # Pure-JAX reference check.
    ref = _gelu_tanh(x @ w1.T) @ w2.T
    assert out.shape == (batch, seq, d_model)
    assert jnp.allclose(out, ref, atol=2e-4, rtol=2e-4), float(
        jnp.max(jnp.abs(out - ref)))

    print("KERNEL_OK")
</pallas_src>

<mosaic_0001>
module attributes {stable_mosaic.version = 11 : i64} {
  func.func @_ffn_kernel(%arg0: i32, %arg1: i32, %arg2: memref<16x128xf32, #tpu.memory_space<vmem>>, %arg3: memref<256x128xf32, #tpu.memory_space<vmem>>, %arg4: memref<128x256xf32, #tpu.memory_space<vmem>>, %arg5: memref<16x128xf32, #tpu.memory_space<vmem>>, %arg6: memref<16x128xf32, #tpu.memory_space<vmem>>) attributes {dimension_semantics = [#tpu.dimension_semantics<parallel>, #tpu.dimension_semantics<arbitrary>], iteration_bounds = array<i64: 1, 1>, scalar_prefetch = 0 : i64, scratch_operands = 1 : i64, tpu.core_type = #tpu.core_type<tc>, window_params = [{transform_indices = @transform_0, window_bounds = array<i64: 16, 128>}, {transform_indices = @transform_1, window_bounds = array<i64: 256, 128>}, {transform_indices = @transform_2, window_bounds = array<i64: 128, 256>}, {transform_indices = @transform_3, window_bounds = array<i64: 16, 128>}]} {
    %c0_i32 = arith.constant 0 : i32
    %0 = arith.cmpi eq, %arg1, %c0_i32 : i32
    %1 = arith.extui %0 : i1 to i32
    %c0_i32_0 = arith.constant 0 : i32
    %2 = arith.cmpi ne, %1, %c0_i32_0 : i32
    scf.if %2 {
      %cst_17 = arith.constant 0.000000e+00 : f32
      %27 = vector.broadcast %cst_17 : f32 to vector<16x128xf32>
      %c0_18 = arith.constant 0 : index
      %c0_19 = arith.constant 0 : index
      %28 = vector.load %arg6[%c0_18, %c0_19] : memref<16x128xf32, #tpu.memory_space<vmem>>, vector<16x128xf32>
      tpu.vector_store %arg6[%c0_18, %c0_19], %27 {strides = array<i32>} : memref<16x128xf32, #tpu.memory_space<vmem>>, vector<16x128xf32>,
    } else {
    }
    %c0 = arith.constant 0 : index
    %c0_1 = arith.constant 0 : index
    %3 = vector.load %arg2[%c0, %c0_1] : memref<16x128xf32, #tpu.memory_space<vmem>>, vector<16x128xf32>
    %c0_2 = arith.constant 0 : index
    %c0_3 = arith.constant 0 : index
    %4 = vector.load %arg3[%c0_2, %c0_3] : memref<256x128xf32, #tpu.memory_space<vmem>>, vector<256x128xf32>
    %cst = arith.constant dense<0.000000e+00> : vector<16x256xf32>
    %5 = tpu.matmul %3, %4, %cst {dimension_numbers = #tpu.dot_dimension_numbers<[1], [1], [0], [0], [0, 0, 1, 0], [], []>} : vector<16x128xf32>, vector<256x128xf32>, vector<16x256xf32> -> vector<16x256xf32>
    %cst_4 = arith.constant 5.000000e-01 : f32
    %6 = vector.broadcast %cst_4 : f32 to vector<16x256xf32>
    %7 = arith.mulf %6, %5 : vector<16x256xf32>
    %cst_5 = arith.constant 4.471500e-02 : f32
    %8 = vector.broadcast %cst_5 : f32 to vector<16x256xf32>
    %9 = arith.mulf %8, %5 : vector<16x256xf32>
    %10 = arith.mulf %9, %5 : vector<16x256xf32>
    %11 = arith.mulf %10, %5 : vector<16x256xf32>
    %12 = arith.addf %5, %11 : vector<16x256xf32>
    %cst_6 = arith.constant 0.797884583 : f32
    %13 = vector.broadcast %cst_6 : f32 to vector<16x256xf32>
    %14 = arith.mulf %13, %12 : vector<16x256xf32>
    %15 = math.tanh %14 : vector<16x256xf32>
    %cst_7 = arith.constant 1.000000e+00 : f32
    %16 = vector.broadcast %cst_7 : f32 to vector<16x256xf32>
    %17 = arith.addf %16, %15 : vector<16x256xf32>
    %18 = arith.mulf %7, %17 : vector<16x256xf32>
    %c0_8 = arith.constant 0 : index
    %c0_9 = arith.constant 0 : index
    %19 = vector.load %arg6[%c0_8, %c0_9] : memref<16x128xf32, #tpu.memory_space<vmem>>, vector<16x128xf32>
    %c0_10 = arith.constant 0 : index
    %c0_11 = arith.constant 0 : index
    %20 = vector.load %arg4[%c0_10, %c0_11] : memref<128x256xf32, #tpu.memory_space<vmem>>, vector<128x256xf32>
    %cst_12 = arith.constant dense<0.000000e+00> : vector<16x128xf32>
    %21 = tpu.matmul %18, %20, %cst_12 {dimension_numbers = #tpu.dot_dimension_numbers<[1], [1], [0], [0], [0, 0, 1, 0], [], []>} : vector<16x256xf32>, vector<128x256xf32>, vector<16x128xf32> -> vector<16x128xf32>
    %22 = arith.addf %19, %21 : vector<16x128xf32>
    %c0_13 = arith.constant 0 : index
    %c0_14 = arith.constant 0 : index
    %23 = vector.load %arg6[%c0_13, %c0_14] : memref<16x128xf32, #tpu.memory_space<vmem>>, vector<16x128xf32>
    tpu.vector_store %arg6[%c0_13, %c0_14], %22 {strides = array<i32>} : memref<16x128xf32, #tpu.memory_space<vmem>>, vector<16x128xf32>,
    %c0_i32_15 = arith.constant 0 : i32
    %24 = arith.cmpi eq, %arg1, %c0_i32_15 : i32
    %25 = arith.extui %24 : i1 to i32
    %c0_i32_16 = arith.constant 0 : i32
    %26 = arith.cmpi ne, %25, %c0_i32_16 : i32
    scf.if %26 {
      %c0_17 = arith.constant 0 : index
      %c0_18 = arith.constant 0 : index
      %27 = vector.load %arg6[%c0_17, %c0_18] : memref<16x128xf32, #tpu.memory_space<vmem>>, vector<16x128xf32>
      %c0_19 = arith.constant 0 : index
      %c0_20 = arith.constant 0 : index
      %28 = vector.load %arg5[%c0_19, %c0_20] : memref<16x128xf32, #tpu.memory_space<vmem>>, vector<16x128xf32>
      tpu.vector_store %arg5[%c0_19, %c0_20], %27 {strides = array<i32>} : memref<16x128xf32, #tpu.memory_space<vmem>>, vector<16x128xf32>,
    } else {
    }
    return
  }
  func.func @transform_0(%arg0: i32, %arg1: i32) -> (i32, i32) {
    %c0_i32 = arith.constant 0 : i32
    %c0_i32_0 = arith.constant 0 : i32
    return %arg0, %c0_i32 : i32, i32
  }
  func.func @transform_1(%arg0: i32, %arg1: i32) -> (i32, i32) {
    %c0_i32 = arith.constant 0 : i32
    %c0_i32_0 = arith.constant 0 : i32
    return %arg1, %c0_i32 : i32, i32
  }
  func.func @transform_2(%arg0: i32, %arg1: i32) -> (i32, i32) {
    %c0_i32 = arith.constant 0 : i32
    %c0_i32_0 = arith.constant 0 : i32
    return %c0_i32, %arg1 : i32, i32
  }
  func.func @transform_3(%arg0: i32, %arg1: i32) -> (i32, i32) {
    %c0_i32 = arith.constant 0 : i32
    %c0_i32_0 = arith.constant 0 : i32
    return %arg0, %c0_i32 : i32, i32
  }
}

</mosaic_0001>

<llo_original>
// kernel: position_wise_ffn.1
$region0: #{position_wise_ffn.1}
  #allocation0 [shape = 'u32[]', space=smem, size = 0x4, offset = 0x4, fixed_abs, tag = 'smem constant byte address 0x4 - core index']
  #allocation1 [shape = 'u32[144,128]{1,0:T(1,128)}', space=vmem, size = 0x12000, scoped, tag = 'internal scratch']
  #allocation2 [shape = 'f32[16,128]{1,0:T(8,128)}', space=vmem, size = 0x2000, scoped, tag = 'scratch operand']
  %s0 = inlined_call_operand.hbm [shape: f32[16,128], index: 0, kind: input, shape index: {}]
  %s1 = inlined_call_operand.hbm [shape: f32[256,128], index: 1, kind: input, shape index: {}]
  %s2 = inlined_call_operand.hbm [shape: f32[128,256], index: 2, kind: input, shape index: {}]
  %s3 = inlined_call_operand.hbm [shape: f32[16,128], index: 3, kind: output, shape index: {}]
  %s4 = sld [smem:[#allocation0]]
  $region42: #{position_wise_ffn.1} parent=0
    _
  %s6 = ssub.s32 1, %s4
  %s7 = scalar_select 0, %s6, %s4
  $region1: #{position_wise_ffn.1} parent=0
    #allocation3 [shape = 'u8[8192]{0}', space=vmem, size = 0x2000, scoped, tag = 'input window, operand 0, single buffered']
    #allocation4 [shape = 's32[1]{0}', space=sflag, size = 0x4, scoped, tag = 'scoped memory for position_wise_ffn.1']
    #allocation5 [shape = 's32[1]{0}', space=sflag, size = 0x4, scoped, tag = 'scoped memory for position_wise_ffn.1']
    #allocation6 [shape = 'u8[131072]{0}', space=vmem, size = 0x20000, scoped, tag = 'input window, operand 1, single buffered']
    #allocation7 [shape = 's32[1]{0}', space=sflag, size = 0x4, scoped, tag = 'scoped memory for position_wise_ffn.1']
    #allocation8 [shape = 'u8[131072]{0}', space=vmem, size = 0x20000, scoped, tag = 'input window, operand 2, single buffered']
    #allocation9 [shape = 'u8[8192]{0}', space=vmem, size = 0x2000, scoped, tag = 'output window, operand 0, single buffered']
    %8 = vsyncpa [#allocation4], 0
    %9 = vsyncpa [#allocation7], 0
    %10 = vsyncpa [#allocation5], 0
    // Predicated region
    $region2: #{position_wise_ffn.1} parent=1 // pred_check
      _
    $region3: #{position_wise_ffn.1} parent=1 // pred_check_branch
      %12 = sbr.rel (0) target = $region5
    $region4: #{position_wise_ffn.1} parent=1 // pred_region
      %s14 = ssub.s32 256, 256
      %15 = vsyncadd [#allocation4], %s14
      %s16 = sshll.u32 [#allocation3], 4
      %s17 = int_to_ptr.vmem [resolvable:$true] %s16
      %22 = dma.hbm_to_vmem [thread:$0]  %s0, 256, %s17, [#allocation4], 128, 128, 8
    $region5: #{position_wise_ffn.1} parent=1 // pred_fallthru
      _
    // Predicated region
    $region6: #{position_wise_ffn.1} parent=1 // pred_check
      _
    $region7: #{position_wise_ffn.1} parent=1 // pred_check_branch
      %24 = sbr.rel (0) target = $region9
    $region8: #{position_wise_ffn.1} parent=1 // pred_region
      %s26 = ssub.s32 4096, 4096
      %27 = vsyncadd [#allocation7], %s26
      %s28 = sshll.u32 [#allocation6], 4
      %s29 = int_to_ptr.vmem [resolvable:$true] %s28
      %34 = dma.hbm_to_vmem [thread:$0]  %s1, 4096, %s29, [#allocation7], 128, 128, 8
    $region9: #{position_wise_ffn.1} parent=1 // pred_fallthru
      _
    // Predicated region
    $region10: #{position_wise_ffn.1} parent=1 // pred_check
      _
    $region11: #{position_wise_ffn.1} parent=1 // pred_check_branch
      %36 = sbr.rel (0) target = $region13
    $region12: #{position_wise_ffn.1} parent=1 // pred_region
      %s38 = ssub.s32 4096, 4096
      %39 = vsyncadd [#allocation7], %s38
      %s40 = sshll.u32 [#allocation8], 4
      %s41 = int_to_ptr.vmem [resolvable:$true] %s40
      %46 = dma.hbm_to_vmem [thread:$0]  %s2, 4096, %s41, [#allocation7], 256, 256, 16
    $region13: #{position_wise_ffn.1} parent=1 // pred_fallthru
      _
    // Predicated region
    $region14: #{position_wise_ffn.1} parent=1 // pred_check
      _
    $region15: #{position_wise_ffn.1} parent=1 // pred_check_branch
      %48 = sbr.rel (0) target = $region17
    $region16: #{position_wise_ffn.1} parent=1 // pred_region
      %49 = dma.done [#allocation4], 256
    $region17: #{position_wise_ffn.1} parent=1 // pred_fallthru
      _
    // Predicated region
    $region18: #{position_wise_ffn.1} parent=1 // pred_check
      _
    $region19: #{position_wise_ffn.1} parent=1 // pred_check_branch
      %51 = sbr.rel (0) target = $region21
    $region20: #{position_wise_ffn.1} parent=1 // pred_region
      %52 = dma.done [#allocation7], 4096
    $region21: #{position_wise_ffn.1} parent=1 // pred_fallthru
      _
    // Predicated region
    $region22: #{position_wise_ffn.1} parent=1 // pred_check
      _
    $region23: #{position_wise_ffn.1} parent=1 // pred_check_branch
      %54 = sbr.rel (0) target = $region25
    $region24: #{position_wise_ffn.1} parent=1 // pred_region
      %55 = dma.done [#allocation7], 4096
    $region25: #{position_wise_ffn.1} parent=1 // pred_fallthru
      _
    %p56 = scmp.eq.s32.totalorder 0, 0
    // Predicated region
    $region26: #{position_wise_ffn.1} parent=1 // pred_check
      %p57 = pneg %p56
    $region27: #{position_wise_ffn.1} parent=1 // pred_check_branch
      %59 = sbr.rel (%p57) target = $region29
    $region28: #{position_wise_ffn.1} parent=1 // pred_region
      %60 = vst [vmem:[#allocation2] sm:$0xff] 0.0
      %61 = vst [vmem:[#allocation2 + $0x8] sm:$0xff] 0.0
    $region29: #{position_wise_ffn.1} parent=1 // pred_fallthru
      _
    %v62 = vld [vmem:[#allocation3] sm:$0xff]
    %v63 = vld [vmem:[#allocation3 + $0x8] sm:$0xff]
    %v64 = vld [vmem:[#allocation6] sm:$0xff]
    %v65 = vld [vmem:[#allocation6 + $0x8] sm:$0xff]
    %v66 = vld [vmem:[#allocation6 + $0x10] sm:$0xff]
    %v67 = vld [vmem:[#allocation6 + $0x18] sm:$0xff]
    %v68 = vld [vmem:[#allocation6 + $0x20] sm:$0xff]
    %v69 = vld [vmem:[#allocation6 + $0x28] sm:$0xff]
    %v70 = vld [vmem:[#allocation6 + $0x30] sm:$0xff]
    %v71 = vld [vmem:[#allocation6 + $0x38] sm:$0xff]
    %v72 = vld [vmem:[#allocation6 + $0x40] sm:$0xff]
    %v73 = vld [vmem:[#allocation6 + $0x48] sm:$0xff]
    %v74 = vld [vmem:[#allocation6 + $0x50] sm:$0xff]
    %v75 = vld [vmem:[#allocation6 + $0x58] sm:$0xff]
    %v76 = vld [vmem:[#allocation6 + $0x60] sm:$0xff]
    %v77 = vld [vmem:[#allocation6 + $0x68] sm:$0xff]
    %v78 = vld [vmem:[#allocation6 + $0x70] sm:$0xff]
    %v79 = vld [vmem:[#allocation6 + $0x78] sm:$0xff]
    %v80 = vld [vmem:[#allocation6 + $0x80] sm:$0xff]
    %v81 = vld [vmem:[#allocation6 + $0x88] sm:$0xff]
    %v82 = vld [vmem:[#allocation6 + $0x90] sm:$0xff]
    %v83 = vld [vmem:[#allocation6 + $0x98] sm:$0xff]
    %v84 = vld [vmem:[#allocation6 + $0xa0] sm:$0xff]
    %v85 = vld [vmem:[#allocation6 + $0xa8] sm:$0xff]
    %v86 = vld [vmem:[#allocation6 + $0xb0] sm:$0xff]
    %v87 = vld [vmem:[#allocation6 + $0xb8] sm:$0xff]
    %v88 = vld [vmem:[#allocation6 + $0xc0] sm:$0xff]
    %v89 = vld [vmem:[#allocation6 + $0xc8] sm:$0xff]
    %v90 = vld [vmem:[#allocation6 + $0xd0] sm:$0xff]
    %v91 = vld [vmem:[#allocation6 + $0xd8] sm:$0xff]
    %v92 = vld [vmem:[#allocation6 + $0xe0] sm:$0xff]
    %v93 = vld [vmem:[#allocation6 + $0xe8] sm:$0xff]
    %v94 = vld [vmem:[#allocation6 + $0xf0] sm:$0xff]
    %v95 = vld [vmem:[#allocation6 + $0xf8] sm:$0xff]
    %96 = vmatprep.subr.mxu0 0.0
    %97 = vmatpush1.xpose.msra.mxu0 %v79
    %98 = vmatprep.subr.mxu0 0.0
    %99 = vmatpush1.xpose.msra.mxu0 %v78
    %100 = vmatprep.subr.mxu0 0.0
    %101 = vmatpush1.xpose.msra.mxu0 %v77
    %102 = vmatprep.subr.mxu0 0.0
    %103 = vmatpush1.xpose.msra.mxu0 %v76
    %104 = vmatprep.subr.mxu0 0.0
    %105 = vmatpush1.xpose.msra.mxu0 %v75
    %106 = vmatprep.subr.mxu0 0.0
    %107 = vmatpush1.xpose.msra.mxu0 %v74
    %108 = vmatprep.subr.mxu0 0.0
    %109 = vmatpush1.xpose.msra.mxu0 %v73
    %110 = vmatprep.subr.mxu0 0.0
    %111 = vmatpush1.xpose.msra.mxu0 %v72
    %112 = vmatprep.subr.mxu0 0.0
    %113 = vmatpush1.xpose.msra.mxu0 %v71
    %114 = vmatprep.subr.mxu0 0.0
    %115 = vmatpush1.xpose.msra.mxu0 %v70
    %116 = vmatprep.subr.mxu0 0.0
    %117 = vmatpush1.xpose.msra.mxu0 %v69
    %118 = vmatprep.subr.mxu0 0.0
    %119 = vmatpush1.xpose.msra.mxu0 %v68
    %120 = vmatprep.subr.mxu0 0.0
    %121 = vmatpush1.xpose.msra.mxu0 %v67
    %122 = vmatprep.subr.mxu0 0.0
    %123 = vmatpush1.xpose.msra.mxu0 %v66
    %124 = vmatprep.subr.mxu0 0.0
    %125 = vmatpush1.xpose.msra.mxu0 %v65
    %126 = vmatprep.subr.mxu0 0.0
    %127 = vmatpush1.xpose.msra.mxu0 %v64
    %128 = vmatprep.subr.mxu0 0.0
    %129 = vmatpush2.xpose.msra.mxu0 %v95
    %130 = vmatprep.subr.mxu0 0.0
    %131 = vmatpush2.xpose.msra.mxu0 %v94
    %132 = vmatprep.subr.mxu0 0.0
    %133 = vmatpush2.xpose.msra.mxu0 %v93
    %134 = vmatprep.subr.mxu0 0.0
    %135 = vmatpush2.xpose.msra.mxu0 %v92
    %136 = vmatprep.subr.mxu0 0.0
    %137 = vmatpush2.xpose.msra.mxu0 %v91
    %138 = vmatprep.subr.mxu0 0.0
    %139 = vmatpush2.xpose.msra.mxu0 %v90
    %140 = vmatprep.subr.mxu0 0.0
    %141 = vmatpush2.xpose.msra.mxu0 %v89
    %142 = vmatprep.subr.mxu0 0.0
    %143 = vmatpush2.xpose.msra.mxu0 %v88
    %144 = vmatprep.subr.mxu0 0.0
    %145 = vmatpush2.xpose.msra.mxu0 %v87
    %146 = vmatprep.subr.mxu0 0.0
    %147 = vmatpush2.xpose.msra.mxu0 %v86
    %148 = vmatprep.subr.mxu0 0.0
    %149 = vmatpush2.xpose.msra.mxu0 %v85
    %150 = vmatprep.subr.mxu0 0.0
    %151 = vmatpush2.xpose.msra.mxu0 %v84
    %152 = vmatprep.subr.mxu0 0.0
    %153 = vmatpush2.xpose.msra.mxu0 %v83
    %154 = vmatprep.subr.mxu0 0.0
    %155 = vmatpush2.xpose.msra.mxu0 %v82
    %156 = vmatprep.subr.mxu0 0.0
    %157 = vmatpush2.xpose.msra.mxu0 %v81
    %158 = vmatprep.subr.mxu0 0.0
    %159 = vmatpush2.xpose.msra.mxu0 %v80
    %160 = vmatprep.mubr.f32.mxu0 0.0
    %161 = vmatmul.mubr.f32.gmra.mxu0 %v62
    %v162 = vpop.f32.mrf.mxu0
    %v163 = vadd.f32 0.0, %v162
    %v164 = vpop.f32.mrf.mxu0
    %v165 = vadd.f32 0.0, %v164
    %166 = vmatprep.mubr.f32.mxu0 0.0
    %167 = vmatmul.mubr.f32.gmra.mxu0 %v63
    %v168 = vpop.f32.mrf.mxu0
    %v169 = vadd.f32 0.0, %v168
    %v170 = vpop.f32.mrf.mxu0
    %v171 = vadd.f32 0.0, %v170
    %172 = vdwg.mxu0
    %v173 = vmul.f32 %v163, 0.5
    %v174 = vmul.f32 %v165, 0.5
    %v175 = vmul.f32 %v169, 0.5
    %v176 = vmul.f32 %v171, 0.5
    %v177 = vmul.f32 %v163, 0.044715
    %v178 = vmul.f32 %v165, 0.044715
    %v179 = vmul.f32 %v169, 0.044715
    %v180 = vmul.f32 %v171, 0.044715
    %v181 = vmul.f32 %v177, %v163
    %v182 = vmul.f32 %v178, %v165
    %v183 = vmul.f32 %v179, %v169
    %v184 = vmul.f32 %v180, %v171
    %v185 = vmul.f32 %v181, %v163
    %v186 = vmul.f32 %v182, %v165
    %v187 = vmul.f32 %v183, %v169
    %v188 = vmul.f32 %v184, %v171
    %v189 = vadd.f32 %v163, %v185
    %v190 = vadd.f32 %v165, %v186
    %v191 = vadd.f32 %v169, %v187
    %v192 = vadd.f32 %v171, %v188
    %v193 = vmul.f32 %v189, 0.7978846
    %v194 = vmul.f32 %v190, 0.7978846
    %v195 = vmul.f32 %v191, 0.7978846
    %v196 = vmul.f32 %v192, 0.7978846
    %v197 = vtanh.pop %v193
    %v198 = vtanh.pop %v194
    %v199 = vtanh.pop %v195
    %v200 = vtanh.pop %v196
    %v201 = vadd.f32 %v197, 1.0
    %v202 = vadd.f32 %v198, 1.0
    %v203 = vadd.f32 %v199, 1.0
    %v204 = vadd.f32 %v200, 1.0
    %v205 = vmul.f32 %v173, %v201
    %v206 = vmul.f32 %v174, %v202
    %v207 = vmul.f32 %v175, %v203
    %v208 = vmul.f32 %v176, %v204
    %v209 = vld [vmem:[#allocation2] sm:$0xff]
    %v210 = vld [vmem:[#allocation2 + $0x8] sm:$0xff]
    %v211 = vld [vmem:[#allocation8] sm:$0xff]
    %v212 = vld [vmem:[#allocation8 + $0x8] sm:$0xff]
    %v213 = vld [vmem:[#allocation8 + $0x10] sm:$0xff]
    %v214 = vld [vmem:[#allocation8 + $0x18] sm:$0xff]
    %v215 = vld [vmem:[#allocation8 + $0x20] sm:$0xff]
    %v216 = vld [vmem:[#allocation8 + $0x28] sm:$0xff]
    %v217 = vld [vmem:[#allocation8 + $0x30] sm:$0xff]
    %v218 = vld [vmem:[#allocation8 + $0x38] sm:$0xff]
    %v219 = vld [vmem:[#allocation8 + $0x40] sm:$0xff]
    %v220 = vld [vmem:[#allocation8 + $0x48] sm:$0xff]
    %v221 = vld [vmem:[#allocation8 + $0x50] sm:$0xff]
    %v222 = vld [vmem:[#allocation8 + $0x58] sm:$0xff]
    %v223 = vld [vmem:[#allocation8 + $0x60] sm:$0xff]
    %v224 = vld [vmem:[#allocation8 + $0x68] sm:$0xff]
    %v225 = vld [vmem:[#allocation8 + $0x70] sm:$0xff]
    %v226 = vld [vmem:[#allocation8 + $0x78] sm:$0xff]
    %v227 = vld [vmem:[#allocation8 + $0x80] sm:$0xff]
    %v228 = vld [vmem:[#allocation8 + $0x88] sm:$0xff]
    %v229 = vld [vmem:[#allocation8 + $0x90] sm:$0xff]
    %v230 = vld [vmem:[#allocation8 + $0x98] sm:$0xff]
    %v231 = vld [vmem:[#allocation8 + $0xa0] sm:$0xff]
    %v232 = vld [vmem:[#allocation8 + $0xa8] sm:$0xff]
    %v233 = vld [vmem:[#allocation8 + $0xb0] sm:$0xff]
    %v234 = vld [vmem:[#allocation8 + $0xb8] sm:$0xff]
    %v235 = vld [vmem:[#allocation8 + $0xc0] sm:$0xff]
    %v236 = vld [vmem:[#allocation8 + $0xc8] sm:$0xff]
    %v237 = vld [vmem:[#allocation8 + $0xd0] sm:$0xff]
    %v238 = vld [vmem:[#allocation8 + $0xd8] sm:$0xff]
    %v239 = vld [vmem:[#allocation8 + $0xe0] sm:$0xff]
    %v240 = vld [vmem:[#allocation8 + $0xe8] sm:$0xff]
    %v241 = vld [vmem:[#allocation8 + $0xf0] sm:$0xff]
    %v242 = vld [vmem:[#allocation8 + $0xf8] sm:$0xff]
    %243 = vmatprep.subr.mxu0 %v242
    %244 = vmatpush1.xpose.msra.mxu0 %v241
    %245 = vmatprep.subr.mxu0 %v240
    %246 = vmatpush1.xpose.msra.mxu0 %v239
    %247 = vmatprep.subr.mxu0 %v238
    %248 = vmatpush1.xpose.msra.mxu0 %v237
    %249 = vmatprep.subr.mxu0 %v236
    %250 = vmatpush1.xpose.msra.mxu0 %v235
    %251 = vmatprep.subr.mxu0 %v234
    %252 = vmatpush1.xpose.msra.mxu0 %v233
    %253 = vmatprep.subr.mxu0 %v232
    %254 = vmatpush1.xpose.msra.mxu0 %v231
    %255 = vmatprep.subr.mxu0 %v230
    %256 = vmatpush1.xpose.msra.mxu0 %v229
    %257 = vmatprep.subr.mxu0 %v228
    %258 = vmatpush1.xpose.msra.mxu0 %v227
    %259 = vmatprep.subr.mxu0 %v226
    %260 = vmatpush1.xpose.msra.mxu0 %v225
    %261 = vmatprep.subr.mxu0 %v224
    %262 = vmatpush1.xpose.msra.mxu0 %v223
    %263 = vmatprep.subr.mxu0 %v222
    %264 = vmatpush1.xpose.msra.mxu0 %v221
    %265 = vmatprep.subr.mxu0 %v220
    %266 = vmatpush1.xpose.msra.mxu0 %v219
    %267 = vmatprep.subr.mxu0 %v218
    %268 = vmatpush1.xpose.msra.mxu0 %v217
    %269 = vmatprep.subr.mxu0 %v216
    %270 = vmatpush1.xpose.msra.mxu0 %v215
    %271 = vmatprep.subr.mxu0 %v214
    %272 = vmatpush1.xpose.msra.mxu0 %v213
    %273 = vmatprep.subr.mxu0 %v212
    %274 = vmatpush1.xpose.msra.mxu0 %v211
    %275 = vmatprep.subr.mxu0 0.0
    %276 = vmatpush2.xpose.msra.mxu0 0.0
    %277 = vmatprep.subr.mxu0 0.0
    %278 = vmatpush2.xpose.msra.mxu0 0.0
    %279 = vmatprep.subr.mxu0 0.0
    %280 = vmatpush2.xpose.msra.mxu0 0.0
    %281 = vmatprep.subr.mxu0 0.0
    %282 = vmatpush2.xpose.msra.mxu0 0.0
    %283 = vmatprep.subr.mxu0 0.0
    %284 = vmatpush2.xpose.msra.mxu0 0.0
    %285 = vmatprep.subr.mxu0 0.0
    %286 = vmatpush2.xpose.msra.mxu0 0.0
    %287 = vmatprep.subr.mxu0 0.0
    %288 = vmatpush2.xpose.msra.mxu0 0.0
    %289 = vmatprep.subr.mxu0 0.0
    %290 = vmatpush2.xpose.msra.mxu0 0.0
    %291 = vmatprep.subr.mxu0 0.0
    %292 = vmatpush2.xpose.msra.mxu0 0.0
    %293 = vmatprep.subr.mxu0 0.0
    %294 = vmatpush2.xpose.msra.mxu0 0.0
    %295 = vmatprep.subr.mxu0 0.0
    %296 = vmatpush2.xpose.msra.mxu0 0.0
    %297 = vmatprep.subr.mxu0 0.0
    %298 = vmatpush2.xpose.msra.mxu0 0.0
    %299 = vmatprep.subr.mxu0 0.0
    %300 = vmatpush2.xpose.msra.mxu0 0.0
    %301 = vmatprep.subr.mxu0 0.0
    %302 = vmatpush2.xpose.msra.mxu0 0.0
    %303 = vmatprep.subr.mxu0 0.0
    %304 = vmatpush2.xpose.msra.mxu0 0.0
    %305 = vmatprep.subr.mxu0 0.0
    %306 = vmatpush2.xpose.msra.mxu0 0.0
    %307 = vmatprep.mubr.f32.mxu0 %v206
    %308 = vmatmul.mubr.f32.gmra.mxu0 %v205
    %v309 = vpop.f32.mrf.mxu0
    %v310 = vadd.f32 0.0, %v309
    %v311 = vpop.f32.mrf.mxu0
    %312 = vmatprep.mubr.f32.mxu0 %v208
    %313 = vmatmul.mubr.f32.gmra.mxu0 %v207
    %v314 = vpop.f32.mrf.mxu0
    %v315 = vadd.f32 0.0, %v314
    %v316 = vpop.f32.mrf.mxu0
    %317 = vdwg.mxu0
    %v318 = vadd.f32 %v209, %v310
    %v319 = vadd.f32 %v210, %v315
    %320 = vst [vmem:[#allocation2] sm:$0xff] %v318
    %321 = vst [vmem:[#allocation2 + $0x8] sm:$0xff] %v319
    // Predicated region
    $region30: #{position_wise_ffn.1} parent=1 // pred_check
      %p322 = pneg %p56
    $region31: #{position_wise_ffn.1} parent=1 // pred_check_branch
      %324 = sbr.rel (%p322) target = $region33
    $region32: #{position_wise_ffn.1} parent=1 // pred_region
      %v325 = vld [vmem:[#allocation2] sm:$0xff]
      %v326 = vld [vmem:[#allocation2 + $0x8] sm:$0xff]
      %327 = vst [vmem:[#allocation9] sm:$0xff] %v325
      %328 = vst [vmem:[#allocation9 + $0x8] sm:$0xff] %v326
    $region33: #{position_wise_ffn.1} parent=1 // pred_fallthru
      _
    // Predicated region
    $region34: #{position_wise_ffn.1} parent=1 // pred_check
      _
    $region35: #{position_wise_ffn.1} parent=1 // pred_check_branch
      %330 = sbr.rel (0) target = $region37
    $region36: #{position_wise_ffn.1} parent=1 // pred_region
      %s332 = ssub.s32 256, 256
      %333 = vsyncadd [#allocation5], %s332
      %s334 = sshll.u32 [#allocation9], 4
      %s335 = int_to_ptr.vmem [resolvable:$true] %s334
      %340 = dma.vmem_to_hbm [thread:$0]  %s335, 256, %s3, [#allocation5], 128, 128, 8
    $region37: #{position_wise_ffn.1} parent=1 // pred_fallthru
      _
    // Predicated region
    $region38: #{position_wise_ffn.1} parent=1 // pred_check
      _
    $region39: #{position_wise_ffn.1} parent=1 // pred_check_branch
      %342 = sbr.rel (0) target = $region41
    $region40: #{position_wise_ffn.1} parent=1 // pred_region
      %343 = dma.done [#allocation5], 256
    $region41: #{position_wise_ffn.1} parent=1 // pred_fallthru
      _
    %344 = vsyncpa [#allocation4], 1
    %345 = vsyncpa [#allocation7], 1
    %346 = vsyncpa [#allocation5], 1

</llo_original>
